<compile_context>
chip_gen: v7x
topology: tpu7x:2x2x1
jax: 0.10.0
libtpu: 0.0.40
codegen_flags: <defaults>
</compile_context>

<pallas_src>
import jax
import jax.numpy as jnp
from jax.experimental import pallas as pl
from jax.experimental.pallas import tpu as pltpu


# ----------------------------- Pallas kernel --------------------------------
def _make_kernel(D):
    K = D + 2          # packed train rows: y_0..y_{D-1}, ||y||^2, 1

    def kernel(row_ref, y_ref, o_ref, m_scr, acc_scr):
        ni = pl.program_id(1)

        @pl.when(ni == 0)
        def _init():
            m_scr[...] = jnp.full_like(m_scr, -jnp.inf)
            acc_scr[...] = jnp.zeros_like(acc_scr)

        x_aug = row_ref[:, 0:K]          # (TB, K) = [a*x, c, 0]
        ypk = y_ref[...]                 # (K, TN) = [y^T ; ||y||^2 ; 1]

        # Shift-invariant logits  a*<x,y> + c*||y||^2, entirely on the MXU.
        logits = jnp.dot(x_aug, ypk, preferred_element_type=jnp.float32)   # (TB, TN)

        # Online softmax over the mixture-component (N) axis.
        m_prev = m_scr[...]
        m_new = jnp.maximum(m_prev, jnp.max(logits, axis=1, keepdims=True))
        alpha = jnp.exp(m_prev - m_new)
        e = jnp.exp(logits - m_new)                                        # (TB, TN)
        # TODO(synk): on v6e/v7x cast (logits - m_new) / e to bf16 for the EUP exp and
        # this MXU dot (f32 accumulate) once re-validated against tolerance; kept f32
        # here so the same kernel is correct and v5e-safe.
        # Single MXU dot contracted over TN gives [sum e*y | sum e*||y||^2 | sum e].
        part = jax.lax.dot_general(e, ypk, (((1,), (1,)), ((), ())),
                                   preferred_element_type=jnp.float32)    # (TB, K)
        acc_scr[...] = alpha * acc_scr[...] + part
        m_scr[...] = m_new

        @pl.when(ni == pl.num_programs(1) - 1)
        def _finalize():
            acc = acc_scr[...]                       # (TB, K)
            l = acc[:, K - 1:K]                      # sum of e  (ones row)
            inv_l = pl.reciprocal(l, approx=True)    # EUP slot
            inv_l = inv_l * (2.0 - l * inv_l)        # one Newton step on (TB, 1)
            scale = row_ref[:, K:K + 1]              # m / (s^2 + const)
            xs = row_ref[:, K + 1:K + 1 + D]         # x / (s^2 + const)
            ev = scale * (acc[:, 0:D] * inv_l)       # m*(w @ y) / (s^2 + const)
            ev = jnp.where(jnp.isnan(ev), 0.0, ev)   # matches torch nan->0 guard
            o_ref[...] = (ev - xs).astype(o_ref.dtype)

    return kernel


# ----------------------------- JAX wrapper -----------------------------------
def _pick_tb(B, max_tb):
    """Largest multiple of 8 that divides B and is <= max_tb, preferring at least
    2 tiles on the (parallel) B axis so v7x's second TensorCore gets work.
    Falls back to the full extent (always a legal block shape)."""
    cands = [d for d in range(8, min(B, max_tb) + 1, 8) if B % d == 0]
    if not cands:
        return B
    two_tile = [d for d in cands if B // d >= 2]
    return max(two_tile) if two_tile else max(cands)


def gmm_score_tikhonov(x, t, train_data, *, constant=1.0,
                       max_tb=128, max_tn=512):
    """Forward pass of GMM_score_TikhonovRegularized.

    x:          (B, D) noisy samples
    t:          (B,)   diffusion times
    train_data: (N, D) GMM component means (training points)
    """
    x = jnp.asarray(x, jnp.float32)
    t = jnp.asarray(t, jnp.float32)
    y = jnp.asarray(train_data, jnp.float32)

    B, D = x.shape
    N, D2 = y.shape
    assert D == D2
    K = D + 2
    W = 2 * D + 3   # packed per-row width

    # Deterministic VP-SDE-style schedule (the PyTorch module takes these as
    # user-supplied callables).
    # TODO(synk): marginal_prob_mean / marginal_prob_std / diffusion_coeff are
    # arbitrary Python callables in the module; a fixed VP-SDE schedule is used here.
    meanf = jnp.exp(-0.5 * t)                        # marginal_prob_mean(t)
    sigma2 = 1.0 - jnp.exp(-t)                       # marginal_prob_std(t)^2
    _g = jnp.ones_like(t)                            # diffusion_coeff(t): unused by forward

    inv_s2 = 1.0 / sigma2
    a = meanf * inv_s2                               # m / s^2
    c = -0.5 * meanf * meanf * inv_s2                # -0.5 m^2 / s^2
    inv_den = 1.0 / (sigma2 + float(constant))       # 1 / (s^2 + constant)

    # Packed per-row operand: [a*x | c | 0 | m*inv_den | x*inv_den]   (B, W)
    row_pack = jnp.concatenate(
        [a[:, None] * x,
         c[:, None],
         jnp.zeros((B, 1), jnp.float32),
         (meanf * inv_den)[:, None],
         inv_den[:, None] * x], axis=1)

    # Packed lane-dense train operand: rows [y^T ; ||y||^2 ; 1], padded to a
    # multiple of 128 columns.  Padded columns: y = 0, ||y||^2 = BIG, ones = 0,
    # so c*BIG (c < 0) pushes padded logits to -huge -> softmax weight 0.
    n_pad = ((N + 127) // 128) * 128
    BIG = 1e30
    y_pack = jnp.concatenate(
        [y.T,                                        # (D, N)
         jnp.sum(y * y, axis=1)[None, :],            # (1, N)
         jnp.ones((1, N), jnp.float32)], axis=0)     # (1, N)
    if n_pad != N:
        pad_cols = jnp.concatenate(
            [jnp.zeros((D, n_pad - N), jnp.float32),
             jnp.full((1, n_pad - N), BIG, jnp.float32),
             jnp.zeros((1, n_pad - N), jnp.float32)], axis=0)
        y_pack = jnp.concatenate([y_pack, pad_cols], axis=1)   # (K, n_pad)

    tb = _pick_tb(B, max_tb)
    tn = max(128, (min(max_tn, n_pad) // 128) * 128)
    while n_pad % tn:
        tn -= 128
    grid = (pl.cdiv(B, tb), n_pad // tn)

    return pl.pallas_call(
        _make_kernel(D),
        out_shape=jax.ShapeDtypeStruct((B, D), jnp.float32),
        grid_spec=pltpu.PrefetchScalarGridSpec(
            num_scalar_prefetch=0,
            grid=grid,
            in_specs=[
                pl.BlockSpec((tb, W), lambda bi, ni: (bi, 0)),    # packed per-row coeffs
                pl.BlockSpec((K, tn), lambda bi, ni: (0, ni)),    # packed train operand
            ],
            out_specs=pl.BlockSpec((tb, D), lambda bi, ni: (bi, 0)),
            scratch_shapes=[
                pltpu.VMEM((tb, 1), jnp.float32),    # running max
                pltpu.VMEM((tb, K), jnp.float32),    # running [sum e*y | sum e*||y||^2 | sum e]
            ]),
        compiler_params=pltpu.CompilerParams(
            dimension_semantics=("parallel", "arbitrary"),
            vmem_limit_bytes=32 * 1024 * 1024),
    )(row_pack, y_pack)


# --------------------------- pure-JAX reference -------------------------------
def _reference(x, t, train_data, constant=1.0):
    meanf = jnp.exp(-0.5 * t)
    sigma = jnp.sqrt(1.0 - jnp.exp(-t))
    diff = x[:, None, :] - meanf[:, None, None] * train_data[None, :, :]   # (B,N,D)
    logpdf = -0.5 * jnp.sum(diff * diff, axis=-1) / (sigma[:, None] ** 2)  # (B,N)
    w = jax.nn.softmax(logpdf, axis=1)
    evals = meanf[:, None] * (w @ train_data)
    evals = jnp.where(jnp.isnan(evals), 0.0, evals)
    return (evals - x) / (sigma[:, None] ** 2 + constant)


if __name__ == "__main__":
    key = jax.random.PRNGKey(0)
    kx, kt, ky, kx2, kt2, ky2 = jax.random.split(key, 6)

    # Small problem matching the module's convention: batch of 2-D points.
    B, N, D = 8, 16, 2
    x = jax.random.normal(kx, (B, D), dtype=jnp.float32)
    t = jax.random.uniform(kt, (B,), dtype=jnp.float32, minval=0.1, maxval=1.0)
    train_data = jax.random.normal(ky, (N, D), dtype=jnp.float32)

    out = gmm_score_tikhonov(x, t, train_data, constant=1.0)
    out = jax.block_until_ready(out)
    ref = _reference(x, t, train_data, constant=1.0)
    assert out.shape == (B, D)
    assert jnp.allclose(out, ref, atol=1e-4, rtol=1e-4), "mismatch vs reference (small)"

    # Second case exercising: 2 B-tiles (parallel) x 2 N-tiles (online-softmax
    # reduction) plus a non-multiple-of-128 N (padded/masked columns).
    B2, N2 = 16, 200
    x2 = jax.random.normal(kx2, (B2, D), dtype=jnp.float32)
    t2 = jax.random.uniform(kt2, (B2,), dtype=jnp.float32, minval=0.1, maxval=1.0)
    train_data2 = jax.random.normal(ky2, (N2, D), dtype=jnp.float32)

    out2 = gmm_score_tikhonov(x2, t2, train_data2, constant=1.0,
                              max_tb=8, max_tn=128)
    out2 = jax.block_until_ready(out2)
    ref2 = _reference(x2, t2, train_data2, constant=1.0)
    assert out2.shape == (B2, D)
    assert jnp.allclose(out2, ref2, atol=1e-4, rtol=1e-4), "mismatch vs reference (tiled)"

    print("KERNEL_OK")
</pallas_src>

<mosaic_0001>
module attributes {stable_mosaic.version = 11 : i64} {
  func.func @kernel(%arg0: i32, %arg1: i32, %arg2: memref<8x7xf32, #tpu.memory_space<vmem>>, %arg3: memref<4x128xf32, #tpu.memory_space<vmem>>, %arg4: memref<8x2xf32, #tpu.memory_space<vmem>>, %arg5: memref<8x1xf32, #tpu.memory_space<vmem>>, %arg6: memref<8x4xf32, #tpu.memory_space<vmem>>) attributes {dimension_semantics = [#tpu.dimension_semantics<parallel>, #tpu.dimension_semantics<arbitrary>], iteration_bounds = array<i64: 1, 1>, scalar_prefetch = 0 : i64, scratch_operands = 2 : i64, tpu.core_type = #tpu.core_type<tc>, window_params = [{transform_indices = @transform_0, window_bounds = array<i64: 8, 7>}, {transform_indices = @transform_1, window_bounds = array<i64: 4, 128>}, {transform_indices = @transform_2, window_bounds = array<i64: 8, 2>}]} {
    %c0_i32 = arith.constant 0 : i32
    %0 = arith.cmpi eq, %arg1, %c0_i32 : i32
    %1 = arith.extui %0 : i1 to i32
    %c0_i32_0 = arith.constant 0 : i32
    %2 = arith.cmpi ne, %1, %c0_i32_0 : i32
    scf.if %2 {
      %cst_16 = arith.constant 0xFF800000 : f32
      %25 = vector.broadcast %cst_16 : f32 to vector<8x1xf32>
      %c0_17 = arith.constant 0 : index
      %c0_18 = arith.constant 0 : index
      %26 = vector.load %arg5[%c0_17, %c0_18] : memref<8x1xf32, #tpu.memory_space<vmem>>, vector<8x1xf32>
      tpu.vector_store %arg5[%c0_17, %c0_18], %25 {strides = array<i32>} : memref<8x1xf32, #tpu.memory_space<vmem>>, vector<8x1xf32>,
      %cst_19 = arith.constant 0.000000e+00 : f32
      %27 = vector.broadcast %cst_19 : f32 to vector<8x4xf32>
      %c0_20 = arith.constant 0 : index
      %c0_21 = arith.constant 0 : index
      %28 = vector.load %arg6[%c0_20, %c0_21] : memref<8x4xf32, #tpu.memory_space<vmem>>, vector<8x4xf32>
      tpu.vector_store %arg6[%c0_20, %c0_21], %27 {strides = array<i32>} : memref<8x4xf32, #tpu.memory_space<vmem>>, vector<8x4xf32>,
    } else {
    }
    %c0 = arith.constant 0 : index
    %c0_1 = arith.constant 0 : index
    %3 = vector.load %arg2[%c0, %c0_1] : memref<8x7xf32, #tpu.memory_space<vmem>>, vector<8x4xf32>
    %c0_2 = arith.constant 0 : index
    %c0_3 = arith.constant 0 : index
    %4 = vector.load %arg3[%c0_2, %c0_3] : memref<4x128xf32, #tpu.memory_space<vmem>>, vector<4x128xf32>
    %cst = arith.constant dense<0.000000e+00> : vector<8x128xf32>
    %5 = tpu.matmul %3, %4, %cst {dimension_numbers = #tpu.dot_dimension_numbers<[1], [0], [0], [1], [0, 0, 1, 1], [], []>} : vector<8x4xf32>, vector<4x128xf32>, vector<8x128xf32> -> vector<8x128xf32>
    %c0_4 = arith.constant 0 : index
    %c0_5 = arith.constant 0 : index
    %6 = vector.load %arg5[%c0_4, %c0_5] : memref<8x1xf32, #tpu.memory_space<vmem>>, vector<8x1xf32>
    %cst_6 = arith.constant dense<0xFF800000> : vector<8xf32>
    %7 = vector.multi_reduction <maximumf>, %5, %cst_6 [1] : vector<8x128xf32> to vector<8xf32>
    %8 = vector.shape_cast %7 : vector<8xf32> to vector<8x1xf32>
    %9 = arith.maximumf %6, %8 : vector<8x1xf32>
    %10 = arith.subf %6, %9 : vector<8x1xf32>
    %11 = math.exp %10 : vector<8x1xf32>
    %12 = vector.broadcast %9 : vector<8x1xf32> to vector<8x128xf32>
    %13 = arith.subf %5, %12 : vector<8x128xf32>
    %14 = math.exp %13 : vector<8x128xf32>
    %cst_7 = arith.constant dense<0.000000e+00> : vector<8x4xf32>
    %15 = tpu.matmul %14, %4, %cst_7 {dimension_numbers = #tpu.dot_dimension_numbers<[1], [1], [0], [0], [0, 0, 1, 0], [], []>} : vector<8x128xf32>, vector<4x128xf32>, vector<8x4xf32> -> vector<8x4xf32>
    %c0_8 = arith.constant 0 : index
    %c0_9 = arith.constant 0 : index
    %16 = vector.load %arg6[%c0_8, %c0_9] : memref<8x4xf32, #tpu.memory_space<vmem>>, vector<8x4xf32>
    %17 = vector.broadcast %11 : vector<8x1xf32> to vector<8x4xf32>
    %18 = arith.mulf %17, %16 : vector<8x4xf32>
    %19 = arith.addf %18, %15 : vector<8x4xf32>
    %c0_10 = arith.constant 0 : index
    %c0_11 = arith.constant 0 : index
    %20 = vector.load %arg6[%c0_10, %c0_11] : memref<8x4xf32, #tpu.memory_space<vmem>>, vector<8x4xf32>
    tpu.vector_store %arg6[%c0_10, %c0_11], %19 {strides = array<i32>} : memref<8x4xf32, #tpu.memory_space<vmem>>, vector<8x4xf32>,
    %c0_12 = arith.constant 0 : index
    %c0_13 = arith.constant 0 : index
    %21 = vector.load %arg5[%c0_12, %c0_13] : memref<8x1xf32, #tpu.memory_space<vmem>>, vector<8x1xf32>
    tpu.vector_store %arg5[%c0_12, %c0_13], %9 {strides = array<i32>} : memref<8x1xf32, #tpu.memory_space<vmem>>, vector<8x1xf32>,
    %c0_i32_14 = arith.constant 0 : i32
    %22 = arith.cmpi eq, %arg1, %c0_i32_14 : i32
    %23 = arith.extui %22 : i1 to i32
    %c0_i32_15 = arith.constant 0 : i32
    %24 = arith.cmpi ne, %23, %c0_i32_15 : i32
    scf.if %24 {
      %c0_16 = arith.constant 0 : index
      %c0_17 = arith.constant 0 : index
      %25 = vector.load %arg6[%c0_16, %c0_17] : memref<8x4xf32, #tpu.memory_space<vmem>>, vector<8x4xf32>
      %26 = vector.extract_strided_slice %25 {offsets = [0, 3], sizes = [8, 1], strides = [1, 1]} : vector<8x4xf32> to vector<8x1xf32>
      %27 = tpu.reciprocal %26 {approx = true} : vector<8x1xf32> -> vector<8x1xf32>
      %28 = arith.mulf %26, %27 : vector<8x1xf32>
      %cst_18 = arith.constant 2.000000e+00 : f32
      %29 = vector.broadcast %cst_18 : f32 to vector<8x1xf32>
      %30 = arith.subf %29, %28 : vector<8x1xf32>
      %31 = arith.mulf %27, %30 : vector<8x1xf32>
      %c0_19 = arith.constant 0 : index
      %c4 = arith.constant 4 : index
      %32 = vector.load %arg2[%c0_19, %c4] : memref<8x7xf32, #tpu.memory_space<vmem>>, vector<8x1xf32>
      %c0_20 = arith.constant 0 : index
      %c5 = arith.constant 5 : index
      %33 = vector.load %arg2[%c0_20, %c5] : memref<8x7xf32, #tpu.memory_space<vmem>>, vector<8x2xf32>
      %34 = vector.extract_strided_slice %25 {offsets = [0, 0], sizes = [8, 2], strides = [1, 1]} : vector<8x4xf32> to vector<8x2xf32>
      %35 = vector.broadcast %31 : vector<8x1xf32> to vector<8x2xf32>
      %36 = arith.mulf %34, %35 : vector<8x2xf32>
      %37 = vector.broadcast %32 : vector<8x1xf32> to vector<8x2xf32>
      %38 = arith.mulf %37, %36 : vector<8x2xf32>
      %39 = arith.cmpf one, %38, %38 : vector<8x2xf32>
      %cst_21 = arith.constant 0.000000e+00 : f32
      %40 = vector.broadcast %cst_21 : f32 to vector<8x2xf32>
      %41 = arith.select %39, %40, %38 : vector<8x2xi1>, vector<8x2xf32>
      %42 = arith.subf %41, %33 : vector<8x2xf32>
      %c0_22 = arith.constant 0 : index
      %c0_23 = arith.constant 0 : index
      %43 = vector.load %arg4[%c0_22, %c0_23] : memref<8x2xf32, #tpu.memory_space<vmem>>, vector<8x2xf32>
      tpu.vector_store %arg4[%c0_22, %c0_23], %42 {strides = array<i32>} : memref<8x2xf32, #tpu.memory_space<vmem>>, vector<8x2xf32>,
    } else {
    }
    return
  }
  func.func @transform_0(%arg0: i32, %arg1: i32) -> (i32, i32) {
    %c0_i32 = arith.constant 0 : i32
    %c0_i32_0 = arith.constant 0 : i32
    return %arg0, %c0_i32 : i32, i32
  }
  func.func @transform_1(%arg0: i32, %arg1: i32) -> (i32, i32) {
    %c0_i32 = arith.constant 0 : i32
    %c0_i32_0 = arith.constant 0 : i32
    return %c0_i32, %arg1 : i32, i32
  }
  func.func @transform_2(%arg0: i32, %arg1: i32) -> (i32, i32) {
    %c0_i32 = arith.constant 0 : i32
    %c0_i32_0 = arith.constant 0 : i32
    return %arg0, %c0_i32 : i32, i32
  }
}

</mosaic_0001>

<llo_original>
// kernel: tpu_custom_call.1
$region0: #{tpu_custom_call.1}
  #allocation0 [shape = 'u32[]', space=smem, size = 0x4, offset = 0x4, fixed_abs, tag = 'smem constant byte address 0x4 - core index']
  #allocation1 [shape = 'u32[144,128]{1,0:T(1,128)}', space=vmem, size = 0x12000, scoped, tag = 'internal scratch']
  #allocation2 [shape = 'f32[8,1]{1,0:T(8,128)}', space=vmem, size = 0x1000, scoped, tag = 'scratch operand']
  #allocation3 [shape = 'f32[8,4]{1,0:T(8,128)}', space=vmem, size = 0x1000, scoped, tag = 'scratch operand']
  %s0 = inlined_call_operand.hbm [shape: f32[8,7], index: 0, kind: input, shape index: {}]
  %s1 = inlined_call_operand.hbm [shape: f32[4,128], index: 1, kind: input, shape index: {}]
  %s2 = inlined_call_operand.vmem [shape: f32[8,2], index: 2, kind: output, shape index: {}]
  %s3 = sld [smem:[#allocation0]]
  $region34: #{tpu_custom_call.1} parent=0
    _
  %s5 = ssub.s32 1, %s3
  %s6 = scalar_select 0, %s5, %s3
  $region1: #{tpu_custom_call.1} parent=0
    #allocation4 [shape = 'u8[4096]{0}', space=vmem, size = 0x1000, scoped, tag = 'input window, operand 0, single buffered']
    #allocation5 [shape = 's32[1]{0}', space=sflag, size = 0x4, scoped, tag = 'scoped memory for tpu_custom_call.1']
    #allocation6 [shape = 'u8[2048]{0}', space=vmem, size = 0x800, scoped, tag = 'input window, operand 1, single buffered']
    #allocation7 [shape = 's32[1]{0}', space=sflag, size = 0x4, scoped, tag = 'scoped memory for tpu_custom_call.1']
    %7 = vsyncpa [#allocation5], 0
    %8 = vsyncpa [#allocation7], 0
    // Predicated region
    $region2: #{tpu_custom_call.1} parent=1 // pred_check
      _
    $region3: #{tpu_custom_call.1} parent=1 // pred_check_branch
      %10 = sbr.rel (0) target = $region5
    $region4: #{tpu_custom_call.1} parent=1 // pred_region
      %s12 = ssub.s32 128, 128
      %13 = vsyncadd [#allocation5], %s12
      %s15 = sshll.u32 [#allocation4], 4
      %s16 = int_to_ptr.vmem [resolvable:$true] %s15
      %18 = dma.hbm_to_vmem [thread:$0]  %s0, 128, %s16, [#allocation5]
    $region5: #{tpu_custom_call.1} parent=1 // pred_fallthru
      _
    // Predicated region
    $region6: #{tpu_custom_call.1} parent=1 // pred_check
      _
    $region7: #{tpu_custom_call.1} parent=1 // pred_check_branch
      %20 = sbr.rel (0) target = $region9
    $region8: #{tpu_custom_call.1} parent=1 // pred_region
      %s22 = ssub.s32 64, 64
      %23 = vsyncadd [#allocation7], %s22
      %s25 = sshll.u32 [#allocation6], 4
      %s26 = int_to_ptr.vmem [resolvable:$true] %s25
      %28 = dma.hbm_to_vmem [thread:$0]  %s1, 64, %s26, [#allocation7]
    $region9: #{tpu_custom_call.1} parent=1 // pred_fallthru
      _
    // Predicated region
    $region10: #{tpu_custom_call.1} parent=1 // pred_check
      _
    $region11: #{tpu_custom_call.1} parent=1 // pred_check_branch
      %30 = sbr.rel (0) target = $region13
    $region12: #{tpu_custom_call.1} parent=1 // pred_region
      %31 = dma.done [#allocation5], 128
    $region13: #{tpu_custom_call.1} parent=1 // pred_fallthru
      _
    // Predicated region
    $region14: #{tpu_custom_call.1} parent=1 // pred_check
      _
    $region15: #{tpu_custom_call.1} parent=1 // pred_check_branch
      %33 = sbr.rel (0) target = $region17
    $region16: #{tpu_custom_call.1} parent=1 // pred_region
      %34 = dma.done [#allocation7], 64
    $region17: #{tpu_custom_call.1} parent=1 // pred_fallthru
      _
    %p35 = scmp.eq.s32.totalorder 0, 0
    // Predicated region
    $region18: #{tpu_custom_call.1} parent=1 // pred_check
      %p36 = pneg %p35
    $region19: #{tpu_custom_call.1} parent=1 // pred_check_branch
      %38 = sbr.rel (%p36) target = $region21
    $region20: #{tpu_custom_call.1} parent=1 // pred_region
      %vm39 = vcmask 7168
      %40 = vst.msk [vmem:[#allocation2] sm:$0xff] %vm39, -inf
      %vm41 = vcmask 31744
      %42 = vst.msk [vmem:[#allocation3] sm:$0xff] %vm41, 0.0
    $region21: #{tpu_custom_call.1} parent=1 // pred_fallthru
      _
    %v43 = vld [vmem:[#allocation4] sm:$0xff]
    %v44 = vld [vmem:[#allocation6] sm:$0xf]
    %vm45 = vcmask 31744
    %v47 = vsel %vm45, %v43, 0
    %vm49 = vcmask 1043456
    %v51 = vsel %vm49, %v44, 0
    %53 = vmatprep.subr.mxu0 0.0
    %54 = vmatpush1.msra.mxu0 %v51
    %55 = vmatprep.subr.mxu0 0.0
    %56 = vmatpush1.msra.mxu0 0.0
    %57 = vmatprep.subr.mxu0 0.0
    %58 = vmatpush1.msra.mxu0 0.0
    %59 = vmatprep.subr.mxu0 0.0
    %60 = vmatpush1.msra.mxu0 0.0
    %61 = vmatprep.subr.mxu0 0.0
    %62 = vmatpush1.msra.mxu0 0.0
    %63 = vmatprep.subr.mxu0 0.0
    %64 = vmatpush1.msra.mxu0 0.0
    %65 = vmatprep.subr.mxu0 0.0
    %66 = vmatpush1.msra.mxu0 0.0
    %67 = vmatprep.subr.mxu0 0.0
    %68 = vmatpush1.msra.mxu0 0.0
    %69 = vmatprep.subr.mxu0 0.0
    %70 = vmatpush1.msra.mxu0 0.0
    %71 = vmatprep.subr.mxu0 0.0
    %72 = vmatpush1.msra.mxu0 0.0
    %73 = vmatprep.subr.mxu0 0.0
    %74 = vmatpush1.msra.mxu0 0.0
    %75 = vmatprep.subr.mxu0 0.0
    %76 = vmatpush1.msra.mxu0 0.0
    %77 = vmatprep.subr.mxu0 0.0
    %78 = vmatpush1.msra.mxu0 0.0
    %79 = vmatprep.subr.mxu0 0.0
    %80 = vmatpush1.msra.mxu0 0.0
    %81 = vmatprep.subr.mxu0 0.0
    %82 = vmatpush1.msra.mxu0 0.0
    %83 = vmatprep.subr.mxu0 0.0
    %84 = vmatpush1.msra.mxu0 0.0
    %85 = vmatprep.subr.mxu0 0.0
    %86 = vmatpush1.msra.mxu0 0.0
    %87 = vmatprep.subr.mxu0 0.0
    %88 = vmatpush1.msra.mxu0 0.0
    %89 = vmatprep.subr.mxu0 0.0
    %90 = vmatpush1.msra.mxu0 0.0
    %91 = vmatprep.subr.mxu0 0.0
    %92 = vmatpush1.msra.mxu0 0.0
    %93 = vmatprep.subr.mxu0 0.0
    %94 = vmatpush1.msra.mxu0 0.0
    %95 = vmatprep.subr.mxu0 0.0
    %96 = vmatpush1.msra.mxu0 0.0
    %97 = vmatprep.subr.mxu0 0.0
    %98 = vmatpush1.msra.mxu0 0.0
    %99 = vmatprep.subr.mxu0 0.0
    %100 = vmatpush1.msra.mxu0 0.0
    %101 = vmatprep.subr.mxu0 0.0
    %102 = vmatpush1.msra.mxu0 0.0
    %103 = vmatprep.subr.mxu0 0.0
    %104 = vmatpush1.msra.mxu0 0.0
    %105 = vmatprep.subr.mxu0 0.0
    %106 = vmatpush1.msra.mxu0 0.0
    %107 = vmatprep.subr.mxu0 0.0
    %108 = vmatpush1.msra.mxu0 0.0
    %109 = vmatprep.subr.mxu0 0.0
    %110 = vmatpush1.msra.mxu0 0.0
    %111 = vmatprep.subr.mxu0 0.0
    %112 = vmatpush1.msra.mxu0 0.0
    %113 = vmatprep.subr.mxu0 0.0
    %114 = vmatpush1.msra.mxu0 0.0
    %115 = vmatprep.subr.mxu0 0.0
    %116 = vmatpush1.msra.mxu0 0.0
    %117 = vmatprep.mubr.f32.mxu0 0.0
    %118 = vmatmul.mubr.f32.gmra.mrb[0].mxu0 %v47
    %v119 = vpop.f32.mrb[0].mxu0
    %v120 = vadd.f32 0.0, %v119
    %v121 = vpop.f32.mrb[0].mxu0
    %122 = vdwg.mxu0
    %v123 = vld [vmem:[#allocation2] sm:$0xff]
    %124 = vmax.xlane.f32.xlu0 %v120
    %v125 = vpop.xlane.xlu0 %124
    %v126 = vmax.f32 %v123, %v125
    %v127 = vsub.f32 %v123, %v126
    %v128 = vmul.f32 %v127, 1.442695
    %v129 = vpow.pop %v128
    %131 = vset.pattern.permute.xlu0 0
    %132 = vperm.xlu0 %131, %v126
    %v133 = vpop.permute.xlu0 %132
    %v135 = vsub.f32 %v120, %v133
    %v136 = vmul.f32 %v135, 1.442695
    %v137 = vpow.pop %v136
    %138 = vmatprep.subr.mxu0 0.0
    %139 = vmatpush1.xpose.msra.mxu0 %v44
    %140 = vmatprep.subr.mxu0 0.0
    %141 = vmatpush1.xpose.msra.mxu0 0.0
    %142 = vmatprep.subr.mxu0 0.0
    %143 = vmatpush1.xpose.msra.mxu0 0.0
    %144 = vmatprep.subr.mxu0 0.0
    %145 = vmatpush1.xpose.msra.mxu0 0.0
    %146 = vmatprep.subr.mxu0 0.0
    %147 = vmatpush1.xpose.msra.mxu0 0.0
    %148 = vmatprep.subr.mxu0 0.0
    %149 = vmatpush1.xpose.msra.mxu0 0.0
    %150 = vmatprep.subr.mxu0 0.0
    %151 = vmatpush1.xpose.msra.mxu0 0.0
    %152 = vmatprep.subr.mxu0 0.0
    %153 = vmatpush1.xpose.msra.mxu0 0.0
    %154 = vmatprep.subr.mxu0 0.0
    %155 = vmatpush1.xpose.msra.mxu0 0.0
    %156 = vmatprep.subr.mxu0 0.0
    %157 = vmatpush1.xpose.msra.mxu0 0.0
    %158 = vmatprep.subr.mxu0 0.0
    %159 = vmatpush1.xpose.msra.mxu0 0.0
    %160 = vmatprep.subr.mxu0 0.0
    %161 = vmatpush1.xpose.msra.mxu0 0.0
    %162 = vmatprep.subr.mxu0 0.0
    %163 = vmatpush1.xpose.msra.mxu0 0.0
    %164 = vmatprep.subr.mxu0 0.0
    %165 = vmatpush1.xpose.msra.mxu0 0.0
    %166 = vmatprep.subr.mxu0 0.0
    %167 = vmatpush1.xpose.msra.mxu0 0.0
    %168 = vmatprep.subr.mxu0 0.0
    %169 = vmatpush1.xpose.msra.mxu0 0.0
    %170 = vmatprep.subr.mxu0 0.0
    %171 = vmatpush1.xpose.msra.mxu0 0.0
    %172 = vmatprep.subr.mxu0 0.0
    %173 = vmatpush1.xpose.msra.mxu0 0.0
    %174 = vmatprep.subr.mxu0 0.0
    %175 = vmatpush1.xpose.msra.mxu0 0.0
    %176 = vmatprep.subr.mxu0 0.0
    %177 = vmatpush1.xpose.msra.mxu0 0.0
    %178 = vmatprep.subr.mxu0 0.0
    %179 = vmatpush1.xpose.msra.mxu0 0.0
    %180 = vmatprep.subr.mxu0 0.0
    %181 = vmatpush1.xpose.msra.mxu0 0.0
    %182 = vmatprep.subr.mxu0 0.0
    %183 = vmatpush1.xpose.msra.mxu0 0.0
    %184 = vmatprep.subr.mxu0 0.0
    %185 = vmatpush1.xpose.msra.mxu0 0.0
    %186 = vmatprep.subr.mxu0 0.0
    %187 = vmatpush1.xpose.msra.mxu0 0.0
    %188 = vmatprep.subr.mxu0 0.0
    %189 = vmatpush1.xpose.msra.mxu0 0.0
    %190 = vmatprep.subr.mxu0 0.0
    %191 = vmatpush1.xpose.msra.mxu0 0.0
    %192 = vmatprep.subr.mxu0 0.0
    %193 = vmatpush1.xpose.msra.mxu0 0.0
    %194 = vmatprep.subr.mxu0 0.0
    %195 = vmatpush1.xpose.msra.mxu0 0.0
    %196 = vmatprep.subr.mxu0 0.0
    %197 = vmatpush1.xpose.msra.mxu0 0.0
    %198 = vmatprep.subr.mxu0 0.0
    %199 = vmatpush1.xpose.msra.mxu0 0.0
    %200 = vmatprep.subr.mxu0 0.0
    %201 = vmatpush1.xpose.msra.mxu0 0.0
    %202 = vmatprep.mubr.f32.mxu0 0.0
    %203 = vmatmul.mubr.f32.gmra.mrb[0].mxu0 %v137
    %v204 = vpop.f32.mrb[0].mxu0
    %v205 = vadd.f32 0.0, %v204
    %v206 = vpop.f32.mrb[0].mxu0
    %207 = vdwg.mxu0
    %v208 = vld [vmem:[#allocation3] sm:$0xff]
    %210 = vset.pattern.permute.xlu0 0
    %211 = vperm.xlu0 %210, %v129
    %v212 = vpop.permute.xlu0 %211
    %v214 = vmul.f32 %v212, %v208
    %v215 = vadd.f32 %v214, %v205
    %216 = vst.msk [vmem:[#allocation3] sm:$0xff] %vm45, %v215
    %vm217 = vcmask 7168
    %218 = vst.msk [vmem:[#allocation2] sm:$0xff] %vm217, %v126
    // Predicated region
    $region22: #{tpu_custom_call.1} parent=1 // pred_check
      %p219 = pneg %p35
    $region23: #{tpu_custom_call.1} parent=1 // pred_check_branch
      %221 = sbr.rel (%p219) target = $region25
    $region24: #{tpu_custom_call.1} parent=1 // pred_region
      %v222 = vld [vmem:[#allocation3] sm:$0xff]
      %v223 = vrcp.pop %v222
      %v224 = vmul.f32 %v222, %v223
      %v225 = vsub.f32 2.0, %v224
      %v226 = vmul.f32 %v223, %v225
      %v227 = vld [vmem:[#allocation4] sm:$0xff]
      %229 = vset.pattern.permute.xlu0 3
      %230 = vperm.xlu0 %229, %v226
      %v231 = vpop.permute.xlu0 %230
      %v233 = vmul.f32 %v222, %v231
      %235 = vset.pattern.permute.xlu0 4
      %236 = vperm.xlu0 %235, %v227
      %v237 = vpop.permute.xlu0 %236
      %v239 = vmul.f32 %v237, %v233
      %vm240 = vcmp.ne.f32.partialorder %v239, %v239
      %v241 = vsel %vm240, 0.0, %v239
      %242 = vrot.lane.b32.xlu0 %v227, 123
      %v243 = vpop.permute.xlu0 %242
      %v245 = vsub.f32 %v241, %v243
      %vm246 = vcmask 15360
      %247 = vst.msk [vmem:[%s2] sm:$0xff] %vm246, %v245
    $region25: #{tpu_custom_call.1} parent=1 // pred_fallthru
      _
    // Predicated region
    $region26: #{tpu_custom_call.1} parent=1 // pred_check
      _
    $region27: #{tpu_custom_call.1} parent=1 // pred_check_branch
      %249 = sbr.rel (0) target = $region29
    $region28: #{tpu_custom_call.1} parent=1 // pred_region
      _
    $region29: #{tpu_custom_call.1} parent=1 // pred_fallthru
      _
    // Predicated region
    $region30: #{tpu_custom_call.1} parent=1 // pred_check
      _
    $region31: #{tpu_custom_call.1} parent=1 // pred_check_branch
      %251 = sbr.rel (0) target = $region33
    $region32: #{tpu_custom_call.1} parent=1 // pred_region
      _
    $region33: #{tpu_custom_call.1} parent=1 // pred_fallthru
      _
    %252 = vsyncpa [#allocation5], 1
    %253 = vsyncpa [#allocation7], 1

</llo_original>
